<compile_context>
chip_gen: v7x
topology: tpu7x:2x2x1
jax: 0.10.0
libtpu: 0.0.40
codegen_flags: <defaults>
</compile_context>

<pallas_src>
import functools

import jax
import jax.numpy as jnp
from jax import lax
from jax.experimental import pallas as pl
from jax.experimental.pallas import tpu as pltpu

LANES = 128
TILE_ROWS_MAX = 8192        # (8192, 128) f32 tile = 4 MiB per pipeline buffer
EPS = 1e-20


def _num_tensorcores() -> int:
    """2 TensorCores per chip on v7x, 1 on v5e/v6e (and unknown chips)."""
    try:
        kind = jax.devices()[0].device_kind.lower()
    except Exception:
        return 1
    return 2 if "v7" in kind else 1


def _sublane_multiple(dtype) -> int:
    """Packed sublane granularity: 8 for 32-bit, 16 for bf16, 32 for 8-bit."""
    itemsize = jnp.dtype(dtype).itemsize
    return max(8, 32 // max(itemsize, 1))


def _poisson_loss_kernel(pred_ref, tgt_ref, out_ref, *,
                         valid_rows, tile_rows, blocks_per_core,
                         total_blocks, needs_mask):
    c = pl.program_id(0)      # per-core axis (CORE_PARALLEL on v7x)
    i = pl.program_id(1)      # streaming reduction axis

    @pl.when(i == 0)
    def _():
        out_ref[...] = jnp.zeros_like(out_ref)

    # Cast to f32 in-kernel (VPU work is fully hidden under the HBM stream).
    p = pred_ref[...].astype(jnp.float32)
    t = tgt_ref[...].astype(jnp.float32)
    val = p - t * jnp.log(jnp.maximum(p, EPS))   # torch clamp(min=eps) + log

    def _fold(v):
        # Fold (tile_rows, 128) into the lane-parallel (8, 128) accumulator:
        # pure VPU adds, no per-step cross-lane reduce.
        return v.reshape(-1, 8, LANES).sum(axis=0)

    if needs_mask:
        block_idx = c * blocks_per_core + i
        is_edge = block_idx >= total_blocks - 1   # last real block or clamped dup

        @pl.when(jnp.logical_not(is_edge))
        def _():
            # Interior blocks: bare path, no mask arithmetic.
            out_ref[...] += _fold(val)

        @pl.when(is_edge)
        def _():
            # Row-level mask: zeros the ragged rows of the last block and every
            # over-range (clamped, duplicated) block.  Garbage in padded rows
            # never propagates because jnp.where selects 0.0 for them.
            row = lax.broadcasted_iota(jnp.int32, val.shape, 0)
            global_row = block_idx * tile_rows + row
            out_ref[...] += _fold(jnp.where(global_row < valid_rows, val, 0.0))
    else:
        out_ref[...] += _fold(val)


def poisson_loss(pred: jax.Array, target: jax.Array) -> jax.Array:
    """Pallas TPU implementation of PoissonLoss.forward(pred, target)."""
    assert pred.shape == target.shape, "pred/target must share a shape"
    n_elems = pred.size
    assert n_elems > 0

    pred_f = pred.reshape(-1)
    tgt_f = target.reshape(-1)

    rows = n_elems // LANES
    n_main = rows * LANES
    tail = n_elems - n_main

    # <128-element ragged tail: tiny plain-JAX epilogue (no jnp.pad, no extra
    # full-tensor HBM copy).
    if tail:
        pt = pred_f[n_main:].astype(jnp.float32)
        tt = tgt_f[n_main:].astype(jnp.float32)
        tail_sum = jnp.sum(pt - tt * jnp.log(jnp.maximum(pt, EPS)))
    else:
        tail_sum = jnp.float32(0.0)

    if rows == 0:
        # Entire tensor is smaller than one lane row; nothing for the kernel.
        return tail_sum / n_elems

    if tail:
        pred2d = pred_f[:n_main].reshape(rows, LANES)
        tgt2d = tgt_f[:n_main].reshape(rows, LANES)
    else:
        pred2d = pred_f.reshape(rows, LANES)
        tgt2d = tgt_f.reshape(rows, LANES)

    ncores = _num_tensorcores()

    # Tile rows: as big as possible, rounded to the packed sublane granularity
    # of the native input dtypes.
    pack = max(_sublane_multiple(pred2d.dtype), _sublane_multiple(tgt2d.dtype))
    tile_rows = min(TILE_ROWS_MAX, ((rows + pack - 1) // pack) * pack)
    total_blocks = pl.cdiv(rows, tile_rows)
    blocks_per_core = pl.cdiv(total_blocks, ncores)

    # Static fast path: mask only when the last block is ragged or a core
    # re-reads a clamped duplicate block.
    needs_mask = (rows % tile_rows != 0) or (total_blocks % ncores != 0)

    def in_map(c, i):
        # Clamp so over-range blocks (zeroed by the mask) never read OOB.
        return (jnp.minimum(c * blocks_per_core + i, total_blocks - 1), 0)

    kernel = functools.partial(
        _poisson_loss_kernel,
        valid_rows=rows,
        tile_rows=tile_rows,
        blocks_per_core=blocks_per_core,
        total_blocks=total_blocks,
        needs_mask=needs_mask,
    )

    # Explicit VMEM budget: 2 inputs x 2 pipeline buffers of the chosen tile,
    # plus headroom.  Well under physical VMEM on v5e/v6e (128 MiB) and v7x
    # (64 MiB).
    in_bytes = tile_rows * LANES * (pred2d.dtype.itemsize + tgt2d.dtype.itemsize)
    vmem_limit_bytes = int(min(max(2 * in_bytes + (8 << 20), 16 << 20), 48 << 20))

    if ncores > 1:
        # v7x: guarantee the per-core axis is actually sharded across both TCs.
        dims = (getattr(pltpu, "CORE_PARALLEL", "parallel"),
                getattr(pltpu, "ARBITRARY", "arbitrary"))
    else:
        dims = ("arbitrary", "arbitrary")

    partials = pl.pallas_call(
        kernel,
        out_shape=jax.ShapeDtypeStruct((ncores * 8, LANES), jnp.float32),
        grid_spec=pltpu.PrefetchScalarGridSpec(
            num_scalar_prefetch=0,
            grid=(ncores, blocks_per_core),
            in_specs=[
                pl.BlockSpec((tile_rows, LANES), in_map),
                pl.BlockSpec((tile_rows, LANES), in_map),
            ],
            # Same block across the reduction axis -> resident accumulator.
            out_specs=pl.BlockSpec((8, LANES), lambda c, i: (c, 0)),
        ),
        compiler_params=pltpu.CompilerParams(
            dimension_semantics=dims,
            vmem_limit_bytes=vmem_limit_bytes,
        ),
    )(pred2d, tgt2d)

    # Tiny (ncores*8, 128) final reduce + mean normalization outside the kernel.
    return (jnp.sum(partials) + tail_sum) / n_elems


def poisson_loss_ref(pred, target):
    """Pure-JAX reference mirroring the PyTorch module."""
    logp = jnp.log(jnp.maximum(pred, EPS))
    return jnp.mean(pred - target * logp)


if __name__ == "__main__":
    key = jax.random.PRNGKey(0)
    k1, k2 = jax.random.split(key)

    # Small shape consistent with a regression head output: [B, C, H, W]
    shape = (2, 4, 16, 16)
    # pred: nonnegative rates (typical Poisson-regression output), include
    # exact zeros to exercise the clamp path.
    pred = jax.nn.relu(jax.random.normal(k1, shape, dtype=jnp.float32))
    # target: nonnegative counts
    target = jax.random.poisson(k2, lam=2.0, shape=shape).astype(jnp.float32)

    loss = jax.block_until_ready(poisson_loss(pred, target))
    ref = jax.block_until_ready(poisson_loss_ref(pred, target))

    assert jnp.allclose(loss, ref, rtol=1e-5, atol=1e-5), (loss, ref)
    print("KERNEL_OK")
</pallas_src>

<mosaic_0001>
module attributes {stable_mosaic.version = 11 : i64} {
  func.func @_poisson_loss_kernel(%arg0: i32, %arg1: i32, %arg2: memref<16x128xf32, #tpu.memory_space<vmem>>, %arg3: memref<16x128xf32, #tpu.memory_space<vmem>>, %arg4: memref<8x128xf32, #tpu.memory_space<vmem>>) attributes {dimension_semantics = [#tpu.dimension_semantics<arbitrary>, #tpu.dimension_semantics<arbitrary>], iteration_bounds = array<i64: 1, 1>, scalar_prefetch = 0 : i64, scratch_operands = 0 : i64, tpu.core_type = #tpu.core_type<tc>, window_params = [{transform_indices = @transform_0, window_bounds = array<i64: 16, 128>}, {transform_indices = @transform_1, window_bounds = array<i64: 16, 128>}, {transform_indices = @transform_2, window_bounds = array<i64: 8, 128>}]} {
    %c0_i32 = arith.constant 0 : i32
    %0 = arith.cmpi eq, %arg1, %c0_i32 : i32
    %1 = arith.extui %0 : i1 to i32
    %c0_i32_0 = arith.constant 0 : i32
    %2 = arith.cmpi ne, %1, %c0_i32_0 : i32
    scf.if %2 {
      %cst_9 = arith.constant 0.000000e+00 : f32
      %15 = vector.broadcast %cst_9 : f32 to vector<8x128xf32>
      %c0_10 = arith.constant 0 : index
      %c0_11 = arith.constant 0 : index
      %16 = vector.load %arg4[%c0_10, %c0_11] : memref<8x128xf32, #tpu.memory_space<vmem>>, vector<8x128xf32>
      tpu.vector_store %arg4[%c0_10, %c0_11], %15 {strides = array<i32>} : memref<8x128xf32, #tpu.memory_space<vmem>>, vector<8x128xf32>,
    } else {
    }
    %c0 = arith.constant 0 : index
    %c0_1 = arith.constant 0 : index
    %3 = vector.load %arg2[%c0, %c0_1] : memref<16x128xf32, #tpu.memory_space<vmem>>, vector<16x128xf32>
    %c0_2 = arith.constant 0 : index
    %c0_3 = arith.constant 0 : index
    %4 = vector.load %arg3[%c0_2, %c0_3] : memref<16x128xf32, #tpu.memory_space<vmem>>, vector<16x128xf32>
    %cst = arith.constant 9.99999968E-21 : f32
    %5 = vector.broadcast %cst : f32 to vector<16x128xf32>
    %6 = arith.maximumf %3, %5 : vector<16x128xf32>
    %7 = math.log %6 : vector<16x128xf32>
    %8 = arith.mulf %4, %7 : vector<16x128xf32>
    %9 = arith.subf %3, %8 : vector<16x128xf32>
    %c0_4 = arith.constant 0 : index
    %c0_5 = arith.constant 0 : index
    %10 = vector.load %arg4[%c0_4, %c0_5] : memref<8x128xf32, #tpu.memory_space<vmem>>, vector<8x128xf32>
    %11 = vector.shape_cast %9 : vector<16x128xf32> to vector<2x8x128xf32>
    %cst_6 = arith.constant dense<0.000000e+00> : vector<8x128xf32>
    %12 = vector.multi_reduction <add>, %11, %cst_6 [0] : vector<2x8x128xf32> to vector<8x128xf32>
    %13 = arith.addf %10, %12 : vector<8x128xf32>
    %c0_7 = arith.constant 0 : index
    %c0_8 = arith.constant 0 : index
    %14 = vector.load %arg4[%c0_7, %c0_8] : memref<8x128xf32, #tpu.memory_space<vmem>>, vector<8x128xf32>
    tpu.vector_store %arg4[%c0_7, %c0_8], %13 {strides = array<i32>} : memref<8x128xf32, #tpu.memory_space<vmem>>, vector<8x128xf32>,
    return
  }
  func.func @transform_0(%arg0: i32, %arg1: i32) -> (i32, i32) {
    %c1_i32 = arith.constant 1 : i32
    %0 = arith.muli %arg0, %c1_i32 : i32
    %1 = arith.addi %0, %arg1 : i32
    %c0_i32 = arith.constant 0 : i32
    %2 = arith.minsi %1, %c0_i32 : i32
    %c0_i32_0 = arith.constant 0 : i32
    %c0_i32_1 = arith.constant 0 : i32
    return %2, %c0_i32_0 : i32, i32
  }
  func.func @transform_1(%arg0: i32, %arg1: i32) -> (i32, i32) {
    %c1_i32 = arith.constant 1 : i32
    %0 = arith.muli %arg0, %c1_i32 : i32
    %1 = arith.addi %0, %arg1 : i32
    %c0_i32 = arith.constant 0 : i32
    %2 = arith.minsi %1, %c0_i32 : i32
    %c0_i32_0 = arith.constant 0 : i32
    %c0_i32_1 = arith.constant 0 : i32
    return %2, %c0_i32_0 : i32, i32
  }
  func.func @transform_2(%arg0: i32, %arg1: i32) -> (i32, i32) {
    %c0_i32 = arith.constant 0 : i32
    %c0_i32_0 = arith.constant 0 : i32
    return %arg0, %c0_i32 : i32, i32
  }
}

</mosaic_0001>

<llo_original>
// kernel: tpu_custom_call.1
$region0: #{tpu_custom_call.1}
  #allocation0 [shape = 'u32[]', space=smem, size = 0x4, offset = 0x4, fixed_abs, tag = 'smem constant byte address 0x4 - core index']
  #allocation1 [shape = 'u32[144,128]{1,0:T(1,128)}', space=vmem, size = 0x12000, scoped, tag = 'internal scratch']
  %s0 = inlined_call_operand.hbm [shape: f32[16,128], index: 0, kind: input, shape index: {}]
  %s1 = inlined_call_operand.hbm [shape: f32[16,128], index: 1, kind: input, shape index: {}]
  %s2 = inlined_call_operand.hbm [shape: f32[8,128], index: 2, kind: output, shape index: {}]
  %s3 = sld [smem:[#allocation0]]
  $region30: #{tpu_custom_call.1} parent=0
    _
  %s5 = ssub.s32 1, %s3
  %s6 = scalar_select 0, %s5, %s3
  $region1: #{tpu_custom_call.1} parent=0
    #allocation2 [shape = 'u8[8192]{0}', space=vmem, size = 0x2000, scoped, tag = 'input window, operand 0, single buffered']
    #allocation3 [shape = 's32[1]{0}', space=sflag, size = 0x4, scoped, tag = 'scoped memory for tpu_custom_call.1']
    #allocation4 [shape = 's32[1]{0}', space=sflag, size = 0x4, scoped, tag = 'scoped memory for tpu_custom_call.1']
    #allocation5 [shape = 'u8[8192]{0}', space=vmem, size = 0x2000, scoped, tag = 'input window, operand 1, single buffered']
    #allocation6 [shape = 's32[1]{0}', space=sflag, size = 0x4, scoped, tag = 'scoped memory for tpu_custom_call.1']
    #allocation7 [shape = 'u8[4096]{0}', space=vmem, size = 0x1000, scoped, tag = 'output window, operand 0, single buffered']
    %7 = vsyncpa [#allocation3], 0
    %8 = vsyncpa [#allocation6], 0
    %9 = vsyncpa [#allocation4], 0
    // Predicated region
    $region2: #{tpu_custom_call.1} parent=1 // pred_check
      _
    $region3: #{tpu_custom_call.1} parent=1 // pred_check_branch
      %11 = sbr.rel (0) target = $region5
    $region4: #{tpu_custom_call.1} parent=1 // pred_region
      %s12 = sadd.s32 0, 0
      %p13 = scmp.lt.s32.totalorder %s12, 0
      %s14 = scalar_select %p13, %s12, 0
      %s15 = smul.u32 2, %s14
      %s17 = ssub.s32 256, 256
      %18 = vsyncadd [#allocation3], %s17
      %s19 = smul.addr %s15, 128
      %s20 = scalar_lea.hbm %s0, %s19
      %s21 = sshll.u32 [#allocation2], 4
      %s22 = int_to_ptr.vmem [resolvable:$true] %s21
      %27 = dma.hbm_to_vmem [thread:$0]  %s20, 256, %s22, [#allocation3], 128, 128, 8
    $region5: #{tpu_custom_call.1} parent=1 // pred_fallthru
      _
    // Predicated region
    $region6: #{tpu_custom_call.1} parent=1 // pred_check
      _
    $region7: #{tpu_custom_call.1} parent=1 // pred_check_branch
      %29 = sbr.rel (0) target = $region9
    $region8: #{tpu_custom_call.1} parent=1 // pred_region
      %s30 = sadd.s32 0, 0
      %p31 = scmp.lt.s32.totalorder %s30, 0
      %s32 = scalar_select %p31, %s30, 0
      %s33 = smul.u32 2, %s32
      %s35 = ssub.s32 256, 256
      %36 = vsyncadd [#allocation6], %s35
      %s37 = smul.addr %s33, 128
      %s38 = scalar_lea.hbm %s1, %s37
      %s39 = sshll.u32 [#allocation5], 4
      %s40 = int_to_ptr.vmem [resolvable:$true] %s39
      %45 = dma.hbm_to_vmem [thread:$0]  %s38, 256, %s40, [#allocation6], 128, 128, 8
    $region9: #{tpu_custom_call.1} parent=1 // pred_fallthru
      _
    // Predicated region
    $region10: #{tpu_custom_call.1} parent=1 // pred_check
      _
    $region11: #{tpu_custom_call.1} parent=1 // pred_check_branch
      %47 = sbr.rel (0) target = $region13
    $region12: #{tpu_custom_call.1} parent=1 // pred_region
      %48 = dma.done [#allocation3], 256
    $region13: #{tpu_custom_call.1} parent=1 // pred_fallthru
      _
    // Predicated region
    $region14: #{tpu_custom_call.1} parent=1 // pred_check
      _
    $region15: #{tpu_custom_call.1} parent=1 // pred_check_branch
      %50 = sbr.rel (0) target = $region17
    $region16: #{tpu_custom_call.1} parent=1 // pred_region
      %51 = dma.done [#allocation6], 256
    $region17: #{tpu_custom_call.1} parent=1 // pred_fallthru
      _
    %s52 = sadd.s32 0, 0
    %p53 = scmp.lt.s32.totalorder %s52, 0
    %s54 = scalar_select %p53, %s52, 0
    %s55 = smul.u32 2, %s54
    %s56 = sadd.s32 0, 0
    %p57 = scmp.lt.s32.totalorder %s56, 0
    %s58 = scalar_select %p57, %s56, 0
    %s59 = smul.u32 2, %s58
    %p60 = scmp.eq.s32.totalorder 0, 0
    // Predicated region
    $region18: #{tpu_custom_call.1} parent=1 // pred_check
      %p61 = pneg %p60
    $region19: #{tpu_custom_call.1} parent=1 // pred_check_branch
      %63 = sbr.rel (%p61) target = $region21
    $region20: #{tpu_custom_call.1} parent=1 // pred_region
      %64 = vst [vmem:[#allocation7] sm:$0xff] 0.0
    $region21: #{tpu_custom_call.1} parent=1 // pred_fallthru
      _
    %v65 = vld [vmem:[#allocation2] sm:$0xff]
    %v66 = vld [vmem:[#allocation2 + $0x8] sm:$0xff]
    %v67 = vld [vmem:[#allocation5] sm:$0xff]
    %v68 = vld [vmem:[#allocation5 + $0x8] sm:$0xff]
    %v69 = vmax.f32 %v65, 1e-20
    %v70 = vmax.f32 %v66, 1e-20
    %v71 = vlog2.pop %v69
    %v72 = vmul.f32 %v71, 0.6931472
    %v73 = vlog2.pop %v70
    %v74 = vmul.f32 %v73, 0.6931472
    %v75 = vmul.f32 %v67, %v72
    %v76 = vmul.f32 %v68, %v74
    %v77 = vsub.f32 %v65, %v75
    %v78 = vsub.f32 %v66, %v76
    %v79 = vld [vmem:[#allocation7] sm:$0xff]
    %v80 = vadd.f32 %v77, %v78
    %v81 = vadd.f32 %v79, %v80
    %82 = vst [vmem:[#allocation7] sm:$0xff] %v81
    // Predicated region
    $region22: #{tpu_custom_call.1} parent=1 // pred_check
      _
    $region23: #{tpu_custom_call.1} parent=1 // pred_check_branch
      %84 = sbr.rel (0) target = $region25
    $region24: #{tpu_custom_call.1} parent=1 // pred_region
      %s86 = ssub.s32 128, 128
      %87 = vsyncadd [#allocation4], %s86
      %s89 = sshll.u32 [#allocation7], 4
      %s90 = int_to_ptr.vmem [resolvable:$true] %s89
      %92 = dma.vmem_to_hbm [thread:$0]  %s90, 128, %s2, [#allocation4]
    $region25: #{tpu_custom_call.1} parent=1 // pred_fallthru
      _
    // Predicated region
    $region26: #{tpu_custom_call.1} parent=1 // pred_check
      _
    $region27: #{tpu_custom_call.1} parent=1 // pred_check_branch
      %94 = sbr.rel (0) target = $region29
    $region28: #{tpu_custom_call.1} parent=1 // pred_region
      %95 = dma.done [#allocation4], 128
    $region29: #{tpu_custom_call.1} parent=1 // pred_fallthru
      _
    %96 = vsyncpa [#allocation3], 1
    %97 = vsyncpa [#allocation6], 1
    %98 = vsyncpa [#allocation4], 1

</llo_original>
